<compile_context>
chip_gen: v7x
topology: tpu7x:2x2x1
jax: 0.10.0
libtpu: 0.0.40
codegen_flags: <defaults>
</compile_context>

<pallas_src>
import jax
import jax.numpy as jnp
from jax.experimental import pallas as pl
from jax.experimental.pallas import tpu as pltpu


IN_FEATURES = 512


def _linear_kernel(x_ref, w_ref, b_ref, o_ref):
    # x_ref: (tb, K), w_ref: (tn, K), b_ref: (1, tn), o_ref: (tb, tn)
    # Contract over K on both operands (x @ w.T) directly on the MXU; no
    # materialized transpose anywhere. Accumulate in f32, add bias in f32.
    acc = jax.lax.dot_general(
        x_ref[...],
        w_ref[...],
        dimension_numbers=(((1,), (1,)), ((), ())),
        preferred_element_type=jnp.float32,
    )
    o_ref[...] = (acc + b_ref[...].astype(jnp.float32)).astype(o_ref.dtype)


def _round_up(v, m):
    return (v + m - 1) // m * m


def linear_projector(x, weight, bias, *, tb=256, tn_max=512,
                     cast_inputs_to_bf16=False):
    """y = x @ weight.T + bias  (nn.Linear(512, num_class) semantics).

    x:      (B, 512) float32
    weight: (num_class, 512) float32
    bias:   (num_class,) float32
    cast_inputs_to_bf16: run the MXU with bf16 inputs (f32 accumulation);
        recommended on v6e/v7x where it halves weight DMA bytes and unlocks
        full MXU throughput.
    """
    B, K = x.shape
    C, K2 = weight.shape
    assert K == IN_FEATURES and K2 == IN_FEATURES
    assert bias.shape == (C,)

    out_dtype = x.dtype  # output stays in the activation dtype (f32)

    # ---- class-dim tiling: lane-dense (multiple of 128) output blocks ------
    c128 = _round_up(C, 128)
    if c128 <= tn_max:
        tn = c128
        Cp = c128                       # single class tile: weight resident
    else:
        tn = tn_max
        Cp = _round_up(c128, tn)        # tile the class dim, pipeline weight DMAs

    # ---- batch tiling: big MXU tiles, pad B instead of asserting -----------
    tb_eff = min(tb, _round_up(B, 8))   # don't over-pad tiny demo batches
    Bp = _round_up(B, tb_eff)

    xp = x if Bp == B else jnp.pad(x, ((0, Bp - B), (0, 0)))
    if Cp == C:
        wp, bp = weight, bias
    else:
        wp = jnp.pad(weight, ((0, Cp - C), (0, 0)))   # zero-padded rows
        bp = jnp.pad(bias, ((0, Cp - C),))
    b2d = bp.reshape(1, Cp)

    if cast_inputs_to_bf16:
        xp = xp.astype(jnp.bfloat16)
        wp = wp.astype(jnp.bfloat16)

    grid = (Bp // tb_eff, Cp // tn)

    # ---- VMEM budget (double-buffered input/output tiles) ------------------
    xsz = jnp.dtype(xp.dtype).itemsize
    wsz = jnp.dtype(wp.dtype).itemsize
    osz = jnp.dtype(out_dtype).itemsize
    tile_bytes = 2 * (tb_eff * K * xsz + tn * K * wsz + tn * 4 + tb_eff * tn * osz)
    vmem_limit = int(min(max(2 * tile_bytes + (4 << 20), 32 << 20), 48 << 20))

    cost = pl.CostEstimate(
        flops=2 * Bp * K * Cp,
        transcendentals=0,
        bytes_accessed=(Bp * K * xsz + Cp * K * wsz + Cp * 4 + Bp * Cp * osz),
    )

    yp = pl.pallas_call(
        _linear_kernel,
        out_shape=jax.ShapeDtypeStruct((Bp, Cp), out_dtype),
        grid_spec=pltpu.PrefetchScalarGridSpec(
            num_scalar_prefetch=0,
            grid=grid,
            in_specs=[
                pl.BlockSpec((tb_eff, K), lambda i, j: (i, 0)),  # x batch tile
                pl.BlockSpec((tn, K), lambda i, j: (j, 0)),      # weight class tile
                pl.BlockSpec((1, tn), lambda i, j: (0, j)),      # bias row tile
            ],
            out_specs=pl.BlockSpec((tb_eff, tn), lambda i, j: (i, j)),
        ),
        compiler_params=pltpu.CompilerParams(
            dimension_semantics=("parallel", "parallel"),
            vmem_limit_bytes=vmem_limit,
        ),
        cost_estimate=cost,
    )(xp, wp, b2d)

    # Slice away batch/class padding.
    return yp[:B, :C]


if __name__ == "__main__":
    # Small shapes consistent with the module (in_features fixed at 512).
    B = 8
    NUM_CLASS = 16

    key = jax.random.PRNGKey(0)
    kx, kw = jax.random.split(key)

    x = jax.random.normal(kx, (B, IN_FEATURES), dtype=jnp.float32)
    # Parameter init mirroring the module: weight ~ N(0, 0.01), bias = 0.
    weight = 0.01 * jax.random.normal(kw, (NUM_CLASS, IN_FEATURES), dtype=jnp.float32)
    bias = jnp.zeros((NUM_CLASS,), dtype=jnp.float32)

    y = jax.block_until_ready(linear_projector(x, weight, bias))
    y_ref = x @ weight.T + bias
    assert y.shape == (B, NUM_CLASS)
    assert jnp.allclose(y, y_ref, atol=1e-4, rtol=1e-4)

    # Ragged shapes: exercises batch padding and class padding to a 128-multiple.
    B2, C2 = 130, 200
    k1, k2, k3 = jax.random.split(key, 3)
    x2 = jax.random.normal(k1, (B2, IN_FEATURES), dtype=jnp.float32)
    w2 = 0.01 * jax.random.normal(k2, (C2, IN_FEATURES), dtype=jnp.float32)
    b2 = jax.random.normal(k3, (C2,), dtype=jnp.float32)
    y2 = jax.block_until_ready(linear_projector(x2, w2, b2))
    y2_ref = x2 @ w2.T + b2
    assert y2.shape == (B2, C2)
    assert jnp.allclose(y2, y2_ref, atol=1e-3, rtol=1e-3)

    # bf16-input MXU path (v6e/v7x perf option): f32 accumulation, looser tol.
    y3 = jax.block_until_ready(
        linear_projector(x2, w2, b2, cast_inputs_to_bf16=True))
    assert y3.shape == (B2, C2) and y3.dtype == jnp.float32
    assert jnp.allclose(y3, y2_ref, atol=1e-2, rtol=5e-2)

    print("KERNEL_OK")
</pallas_src>

<mosaic_0001>
module attributes {stable_mosaic.version = 11 : i64} {
  func.func @_linear_kernel(%arg0: i32, %arg1: i32, %arg2: memref<8x512xf32, #tpu.memory_space<vmem>>, %arg3: memref<128x512xf32, #tpu.memory_space<vmem>>, %arg4: memref<1x128xf32, #tpu.memory_space<vmem>>, %arg5: memref<8x128xf32, #tpu.memory_space<vmem>>) attributes {dimension_semantics = [#tpu.dimension_semantics<parallel>, #tpu.dimension_semantics<parallel>], iteration_bounds = array<i64: 1, 1>, scalar_prefetch = 0 : i64, scratch_operands = 0 : i64, tpu.core_type = #tpu.core_type<tc>, window_params = [{transform_indices = @transform_0, window_bounds = array<i64: 8, 512>}, {transform_indices = @transform_1, window_bounds = array<i64: 128, 512>}, {transform_indices = @transform_2, window_bounds = array<i64: 1, 128>}, {transform_indices = @transform_3, window_bounds = array<i64: 8, 128>}]} {
    %c0 = arith.constant 0 : index
    %c0_0 = arith.constant 0 : index
    %0 = vector.load %arg2[%c0, %c0_0] : memref<8x512xf32, #tpu.memory_space<vmem>>, vector<8x512xf32>
    %c0_1 = arith.constant 0 : index
    %c0_2 = arith.constant 0 : index
    %1 = vector.load %arg3[%c0_1, %c0_2] : memref<128x512xf32, #tpu.memory_space<vmem>>, vector<128x512xf32>
    %cst = arith.constant dense<0.000000e+00> : vector<8x128xf32>
    %2 = tpu.matmul %0, %1, %cst {dimension_numbers = #tpu.dot_dimension_numbers<[1], [1], [0], [0], [0, 0, 1, 0], [], []>} : vector<8x512xf32>, vector<128x512xf32>, vector<8x128xf32> -> vector<8x128xf32>
    %c0_3 = arith.constant 0 : index
    %c0_4 = arith.constant 0 : index
    %3 = vector.load %arg4[%c0_3, %c0_4] : memref<1x128xf32, #tpu.memory_space<vmem>>, vector<1x128xf32>
    %4 = vector.broadcast %3 : vector<1x128xf32> to vector<8x128xf32>
    %5 = arith.addf %2, %4 : vector<8x128xf32>
    %c0_5 = arith.constant 0 : index
    %c0_6 = arith.constant 0 : index
    %6 = vector.load %arg5[%c0_5, %c0_6] : memref<8x128xf32, #tpu.memory_space<vmem>>, vector<8x128xf32>
    tpu.vector_store %arg5[%c0_5, %c0_6], %5 {strides = array<i32>} : memref<8x128xf32, #tpu.memory_space<vmem>>, vector<8x128xf32>,
    return
  }
  func.func @transform_0(%arg0: i32, %arg1: i32) -> (i32, i32) {
    %c0_i32 = arith.constant 0 : i32
    %c0_i32_0 = arith.constant 0 : i32
    return %arg0, %c0_i32 : i32, i32
  }
  func.func @transform_1(%arg0: i32, %arg1: i32) -> (i32, i32) {
    %c0_i32 = arith.constant 0 : i32
    %c0_i32_0 = arith.constant 0 : i32
    return %arg1, %c0_i32 : i32, i32
  }
  func.func @transform_2(%arg0: i32, %arg1: i32) -> (i32, i32) {
    %c0_i32 = arith.constant 0 : i32
    %c0_i32_0 = arith.constant 0 : i32
    return %c0_i32, %arg1 : i32, i32
  }
  func.func @transform_3(%arg0: i32, %arg1: i32) -> (i32, i32) {
    %c0_i32 = arith.constant 0 : i32
    return %arg0, %arg1 : i32, i32
  }
}

</mosaic_0001>

<llo_original>
// kernel: tpu_custom_call.1
$region0: #{tpu_custom_call.1}
  #allocation0 [shape = 'u32[]', space=smem, size = 0x4, offset = 0x4, fixed_abs, tag = 'smem constant byte address 0x4 - core index']
  #allocation1 [shape = 'u32[144,128]{1,0:T(1,128)}', space=vmem, size = 0x12000, scoped, tag = 'internal scratch']
  %s0 = inlined_call_operand.hbm [shape: f32[8,512], index: 0, kind: input, shape index: {}]
  %s1 = inlined_call_operand.hbm [shape: f32[128,512], index: 1, kind: input, shape index: {}]
  %s2 = inlined_call_operand.vmem [shape: f32[1,128], index: 2, kind: input, shape index: {}]
  %s3 = inlined_call_operand.hbm [shape: f32[8,128], index: 3, kind: output, shape index: {}]
  %s4 = sld [smem:[#allocation0]]
  $region30: #{tpu_custom_call.1} parent=0
    _
  %s6 = ssub.s32 1, %s4
  %s7 = scalar_select 0, %s6, %s4
  $region1: #{tpu_custom_call.1} parent=0
    #allocation2 [shape = 'u8[16384]{0}', space=vmem, size = 0x4000, scoped, tag = 'input window, operand 0, single buffered']
    #allocation3 [shape = 's32[1]{0}', space=sflag, size = 0x4, scoped, tag = 'scoped memory for tpu_custom_call.1']
    #allocation4 [shape = 's32[1]{0}', space=sflag, size = 0x4, scoped, tag = 'scoped memory for tpu_custom_call.1']
    #allocation5 [shape = 'u8[262144]{0}', space=vmem, size = 0x40000, scoped, tag = 'input window, operand 1, single buffered']
    #allocation6 [shape = 's32[1]{0}', space=sflag, size = 0x4, scoped, tag = 'scoped memory for tpu_custom_call.1']
    #allocation7 [shape = 'u8[4096]{0}', space=vmem, size = 0x1000, scoped, tag = 'output window, operand 0, single buffered']
    %8 = vsyncpa [#allocation3], 0
    %9 = vsyncpa [#allocation6], 0
    %10 = vsyncpa [#allocation4], 0
    // Predicated region
    $region2: #{tpu_custom_call.1} parent=1 // pred_check
      _
    $region3: #{tpu_custom_call.1} parent=1 // pred_check_branch
      %12 = sbr.rel (0) target = $region5
    $region4: #{tpu_custom_call.1} parent=1 // pred_region
      %s14 = ssub.s32 512, 512
      %15 = vsyncadd [#allocation3], %s14
      %s17 = sshll.u32 [#allocation2], 4
      %s18 = int_to_ptr.vmem [resolvable:$true] %s17
      %20 = dma.hbm_to_vmem [thread:$0]  %s0, 512, %s18, [#allocation3]
    $region5: #{tpu_custom_call.1} parent=1 // pred_fallthru
      _
    // Predicated region
    $region6: #{tpu_custom_call.1} parent=1 // pred_check
      _
    $region7: #{tpu_custom_call.1} parent=1 // pred_check_branch
      %22 = sbr.rel (0) target = $region9
    $region8: #{tpu_custom_call.1} parent=1 // pred_region
      %s24 = ssub.s32 8192, 8192
      %25 = vsyncadd [#allocation6], %s24
      %s26 = sshll.u32 [#allocation5], 4
      %s27 = int_to_ptr.vmem [resolvable:$true] %s26
      %32 = dma.hbm_to_vmem [thread:$0]  %s1, 8192, %s27, [#allocation6], 512, 512, 32
    $region9: #{tpu_custom_call.1} parent=1 // pred_fallthru
      _
    // Predicated region
    $region10: #{tpu_custom_call.1} parent=1 // pred_check
      _
    $region11: #{tpu_custom_call.1} parent=1 // pred_check_branch
      %34 = sbr.rel (0) target = $region13
    $region12: #{tpu_custom_call.1} parent=1 // pred_region
      _
    $region13: #{tpu_custom_call.1} parent=1 // pred_fallthru
      _
    // Predicated region
    $region14: #{tpu_custom_call.1} parent=1 // pred_check
      _
    $region15: #{tpu_custom_call.1} parent=1 // pred_check_branch
      %36 = sbr.rel (0) target = $region17
    $region16: #{tpu_custom_call.1} parent=1 // pred_region
      %37 = dma.done [#allocation3], 512
    $region17: #{tpu_custom_call.1} parent=1 // pred_fallthru
      _
    // Predicated region
    $region18: #{tpu_custom_call.1} parent=1 // pred_check
      _
    $region19: #{tpu_custom_call.1} parent=1 // pred_check_branch
      %39 = sbr.rel (0) target = $region21
    $region20: #{tpu_custom_call.1} parent=1 // pred_region
      %40 = dma.done [#allocation6], 8192
    $region21: #{tpu_custom_call.1} parent=1 // pred_fallthru
      _
    %v41 = vld [vmem:[#allocation2] sm:$0xff]
    %v42 = vld [vmem:[#allocation2 + $0x8] sm:$0xff]
    %v43 = vld [vmem:[#allocation2 + $0x10] sm:$0xff]
    %v44 = vld [vmem:[#allocation2 + $0x18] sm:$0xff]
    %v45 = vld [vmem:[#allocation5] sm:$0xff]
    %v46 = vld [vmem:[#allocation5 + $0x8] sm:$0xff]
    %v47 = vld [vmem:[#allocation5 + $0x10] sm:$0xff]
    %v48 = vld [vmem:[#allocation5 + $0x18] sm:$0xff]
    %v49 = vld [vmem:[#allocation5 + $0x20] sm:$0xff]
    %v50 = vld [vmem:[#allocation5 + $0x28] sm:$0xff]
    %v51 = vld [vmem:[#allocation5 + $0x30] sm:$0xff]
    %v52 = vld [vmem:[#allocation5 + $0x38] sm:$0xff]
    %v53 = vld [vmem:[#allocation5 + $0x40] sm:$0xff]
    %v54 = vld [vmem:[#allocation5 + $0x48] sm:$0xff]
    %v55 = vld [vmem:[#allocation5 + $0x50] sm:$0xff]
    %v56 = vld [vmem:[#allocation5 + $0x58] sm:$0xff]
    %v57 = vld [vmem:[#allocation5 + $0x60] sm:$0xff]
    %v58 = vld [vmem:[#allocation5 + $0x68] sm:$0xff]
    %v59 = vld [vmem:[#allocation5 + $0x70] sm:$0xff]
    %v60 = vld [vmem:[#allocation5 + $0x78] sm:$0xff]
    %v61 = vld [vmem:[#allocation5 + $0x80] sm:$0xff]
    %v62 = vld [vmem:[#allocation5 + $0x88] sm:$0xff]
    %v63 = vld [vmem:[#allocation5 + $0x90] sm:$0xff]
    %v64 = vld [vmem:[#allocation5 + $0x98] sm:$0xff]
    %v65 = vld [vmem:[#allocation5 + $0xa0] sm:$0xff]
    %v66 = vld [vmem:[#allocation5 + $0xa8] sm:$0xff]
    %v67 = vld [vmem:[#allocation5 + $0xb0] sm:$0xff]
    %v68 = vld [vmem:[#allocation5 + $0xb8] sm:$0xff]
    %v69 = vld [vmem:[#allocation5 + $0xc0] sm:$0xff]
    %v70 = vld [vmem:[#allocation5 + $0xc8] sm:$0xff]
    %v71 = vld [vmem:[#allocation5 + $0xd0] sm:$0xff]
    %v72 = vld [vmem:[#allocation5 + $0xd8] sm:$0xff]
    %v73 = vld [vmem:[#allocation5 + $0xe0] sm:$0xff]
    %v74 = vld [vmem:[#allocation5 + $0xe8] sm:$0xff]
    %v75 = vld [vmem:[#allocation5 + $0xf0] sm:$0xff]
    %v76 = vld [vmem:[#allocation5 + $0xf8] sm:$0xff]
    %v77 = vld [vmem:[#allocation5 + $0x100] sm:$0xff]
    %v78 = vld [vmem:[#allocation5 + $0x108] sm:$0xff]
    %v79 = vld [vmem:[#allocation5 + $0x110] sm:$0xff]
    %v80 = vld [vmem:[#allocation5 + $0x118] sm:$0xff]
    %v81 = vld [vmem:[#allocation5 + $0x120] sm:$0xff]
    %v82 = vld [vmem:[#allocation5 + $0x128] sm:$0xff]
    %v83 = vld [vmem:[#allocation5 + $0x130] sm:$0xff]
    %v84 = vld [vmem:[#allocation5 + $0x138] sm:$0xff]
    %v85 = vld [vmem:[#allocation5 + $0x140] sm:$0xff]
    %v86 = vld [vmem:[#allocation5 + $0x148] sm:$0xff]
    %v87 = vld [vmem:[#allocation5 + $0x150] sm:$0xff]
    %v88 = vld [vmem:[#allocation5 + $0x158] sm:$0xff]
    %v89 = vld [vmem:[#allocation5 + $0x160] sm:$0xff]
    %v90 = vld [vmem:[#allocation5 + $0x168] sm:$0xff]
    %v91 = vld [vmem:[#allocation5 + $0x170] sm:$0xff]
    %v92 = vld [vmem:[#allocation5 + $0x178] sm:$0xff]
    %v93 = vld [vmem:[#allocation5 + $0x180] sm:$0xff]
    %v94 = vld [vmem:[#allocation5 + $0x188] sm:$0xff]
    %v95 = vld [vmem:[#allocation5 + $0x190] sm:$0xff]
    %v96 = vld [vmem:[#allocation5 + $0x198] sm:$0xff]
    %v97 = vld [vmem:[#allocation5 + $0x1a0] sm:$0xff]
    %v98 = vld [vmem:[#allocation5 + $0x1a8] sm:$0xff]
    %v99 = vld [vmem:[#allocation5 + $0x1b0] sm:$0xff]
    %v100 = vld [vmem:[#allocation5 + $0x1b8] sm:$0xff]
    %v101 = vld [vmem:[#allocation5 + $0x1c0] sm:$0xff]
    %v102 = vld [vmem:[#allocation5 + $0x1c8] sm:$0xff]
    %v103 = vld [vmem:[#allocation5 + $0x1d0] sm:$0xff]
    %v104 = vld [vmem:[#allocation5 + $0x1d8] sm:$0xff]
    %v105 = vld [vmem:[#allocation5 + $0x1e0] sm:$0xff]
    %v106 = vld [vmem:[#allocation5 + $0x1e8] sm:$0xff]
    %v107 = vld [vmem:[#allocation5 + $0x1f0] sm:$0xff]
    %v108 = vld [vmem:[#allocation5 + $0x1f8] sm:$0xff]
    %v109 = vld [vmem:[%s2] sm:$0x1]
    %v111 = vlaneseq
    %v112 = vshrl.u32 %v111, 7
    %v113 = vsub.s32 0, %v112
    %v114 = vrot.slane %v109, %v113
    %116 = vmatprep.subr.mxu0 %v46
    %117 = vmatpush1.xpose.msra.mxu0 %v45
    %118 = vmatprep.subr.mxu0 %v50
    %119 = vmatpush1.xpose.msra.mxu0 %v49
    %120 = vmatprep.subr.mxu0 %v54
    %121 = vmatpush1.xpose.msra.mxu0 %v53
    %122 = vmatprep.subr.mxu0 %v58
    %123 = vmatpush1.xpose.msra.mxu0 %v57
    %124 = vmatprep.subr.mxu0 %v62
    %125 = vmatpush1.xpose.msra.mxu0 %v61
    %126 = vmatprep.subr.mxu0 %v66
    %127 = vmatpush1.xpose.msra.mxu0 %v65
    %128 = vmatprep.subr.mxu0 %v70
    %129 = vmatpush1.xpose.msra.mxu0 %v69
    %130 = vmatprep.subr.mxu0 %v74
    %131 = vmatpush1.xpose.msra.mxu0 %v73
    %132 = vmatprep.subr.mxu0 %v78
    %133 = vmatpush1.xpose.msra.mxu0 %v77
    %134 = vmatprep.subr.mxu0 %v82
    %135 = vmatpush1.xpose.msra.mxu0 %v81
    %136 = vmatprep.subr.mxu0 %v86
    %137 = vmatpush1.xpose.msra.mxu0 %v85
    %138 = vmatprep.subr.mxu0 %v90
    %139 = vmatpush1.xpose.msra.mxu0 %v89
    %140 = vmatprep.subr.mxu0 %v94
    %141 = vmatpush1.xpose.msra.mxu0 %v93
    %142 = vmatprep.subr.mxu0 %v98
    %143 = vmatpush1.xpose.msra.mxu0 %v97
    %144 = vmatprep.subr.mxu0 %v102
    %145 = vmatpush1.xpose.msra.mxu0 %v101
    %146 = vmatprep.subr.mxu0 %v106
    %147 = vmatpush1.xpose.msra.mxu0 %v105
    %148 = vmatprep.subr.mxu0 0.0
    %149 = vmatpush1.xpose.msra.mxu0 0.0
    %150 = vmatprep.subr.mxu0 0.0
    %151 = vmatpush1.xpose.msra.mxu0 0.0
    %152 = vmatprep.subr.mxu0 0.0
    %153 = vmatpush1.xpose.msra.mxu0 0.0
    %154 = vmatprep.subr.mxu0 0.0
    %155 = vmatpush1.xpose.msra.mxu0 0.0
    %156 = vmatprep.subr.mxu0 0.0
    %157 = vmatpush1.xpose.msra.mxu0 0.0
    %158 = vmatprep.subr.mxu0 0.0
    %159 = vmatpush1.xpose.msra.mxu0 0.0
    %160 = vmatprep.subr.mxu0 0.0
    %161 = vmatpush1.xpose.msra.mxu0 0.0
    %162 = vmatprep.subr.mxu0 0.0
    %163 = vmatpush1.xpose.msra.mxu0 0.0
    %164 = vmatprep.subr.mxu0 0.0
    %165 = vmatpush1.xpose.msra.mxu0 0.0
    %166 = vmatprep.subr.mxu0 0.0
    %167 = vmatpush1.xpose.msra.mxu0 0.0
    %168 = vmatprep.subr.mxu0 0.0
    %169 = vmatpush1.xpose.msra.mxu0 0.0
    %170 = vmatprep.subr.mxu0 0.0
    %171 = vmatpush1.xpose.msra.mxu0 0.0
    %172 = vmatprep.subr.mxu0 0.0
    %173 = vmatpush1.xpose.msra.mxu0 0.0
    %174 = vmatprep.subr.mxu0 0.0
    %175 = vmatpush1.xpose.msra.mxu0 0.0
    %176 = vmatprep.subr.mxu0 0.0
    %177 = vmatpush1.xpose.msra.mxu0 0.0
    %178 = vmatprep.subr.mxu0 0.0
    %179 = vmatpush1.xpose.msra.mxu0 0.0
    %180 = vmatprep.mubr.f32.mxu0 %v42
    %181 = vmatmul.mubr.f32.gmra.mrb[0].mxu0 %v41
    %v182 = vpop.f32.mrb[0].mxu0
    %v183 = vadd.f32 %v114, %v182
    %v184 = vpop.f32.mrb[0].mxu0
    %185 = vdwg.mxu0
    %186 = vmatprep.subr.mxu0 %v48
    %187 = vmatpush1.xpose.msra.mxu0 %v47
    %188 = vmatprep.subr.mxu0 %v52
    %189 = vmatpush1.xpose.msra.mxu0 %v51
    %190 = vmatprep.subr.mxu0 %v56
    %191 = vmatpush1.xpose.msra.mxu0 %v55
    %192 = vmatprep.subr.mxu0 %v60
    %193 = vmatpush1.xpose.msra.mxu0 %v59
    %194 = vmatprep.subr.mxu0 %v64
    %195 = vmatpush1.xpose.msra.mxu0 %v63
    %196 = vmatprep.subr.mxu0 %v68
    %197 = vmatpush1.xpose.msra.mxu0 %v67
    %198 = vmatprep.subr.mxu0 %v72
    %199 = vmatpush1.xpose.msra.mxu0 %v71
    %200 = vmatprep.subr.mxu0 %v76
    %201 = vmatpush1.xpose.msra.mxu0 %v75
    %202 = vmatprep.subr.mxu0 %v80
    %203 = vmatpush1.xpose.msra.mxu0 %v79
    %204 = vmatprep.subr.mxu0 %v84
    %205 = vmatpush1.xpose.msra.mxu0 %v83
    %206 = vmatprep.subr.mxu0 %v88
    %207 = vmatpush1.xpose.msra.mxu0 %v87
    %208 = vmatprep.subr.mxu0 %v92
    %209 = vmatpush1.xpose.msra.mxu0 %v91
    %210 = vmatprep.subr.mxu0 %v96
    %211 = vmatpush1.xpose.msra.mxu0 %v95
    %212 = vmatprep.subr.mxu0 %v100
    %213 = vmatpush1.xpose.msra.mxu0 %v99
    %214 = vmatprep.subr.mxu0 %v104
    %215 = vmatpush1.xpose.msra.mxu0 %v103
    %216 = vmatprep.subr.mxu0 %v108
    %217 = vmatpush1.xpose.msra.mxu0 %v107
    %218 = vmatprep.subr.mxu0 0.0
    %219 = vmatpush1.xpose.msra.mxu0 0.0
    %220 = vmatprep.subr.mxu0 0.0
    %221 = vmatpush1.xpose.msra.mxu0 0.0
    %222 = vmatprep.subr.mxu0 0.0
    %223 = vmatpush1.xpose.msra.mxu0 0.0
    %224 = vmatprep.subr.mxu0 0.0
    %225 = vmatpush1.xpose.msra.mxu0 0.0
    %226 = vmatprep.subr.mxu0 0.0
    %227 = vmatpush1.xpose.msra.mxu0 0.0
    %228 = vmatprep.subr.mxu0 0.0
    %229 = vmatpush1.xpose.msra.mxu0 0.0
    %230 = vmatprep.subr.mxu0 0.0
    %231 = vmatpush1.xpose.msra.mxu0 0.0
    %232 = vmatprep.subr.mxu0 0.0
    %233 = vmatpush1.xpose.msra.mxu0 0.0
    %234 = vmatprep.subr.mxu0 0.0
    %235 = vmatpush1.xpose.msra.mxu0 0.0
    %236 = vmatprep.subr.mxu0 0.0
    %237 = vmatpush1.xpose.msra.mxu0 0.0
    %238 = vmatprep.subr.mxu0 0.0
    %239 = vmatpush1.xpose.msra.mxu0 0.0
    %240 = vmatprep.subr.mxu0 0.0
    %241 = vmatpush1.xpose.msra.mxu0 0.0
    %242 = vmatprep.subr.mxu0 0.0
    %243 = vmatpush1.xpose.msra.mxu0 0.0
    %244 = vmatprep.subr.mxu0 0.0
    %245 = vmatpush1.xpose.msra.mxu0 0.0
    %246 = vmatprep.subr.mxu0 0.0
    %247 = vmatpush1.xpose.msra.mxu0 0.0
    %248 = vmatprep.subr.mxu0 0.0
    %249 = vmatpush1.xpose.msra.mxu0 0.0
    %250 = vmatprep.mubr.f32.mxu0 %v44
    %251 = vmatmul.mubr.f32.gmra.mrb[0].mxu0 %v43
    %v252 = vpop.f32.mrb[0].mxu0
    %v253 = vadd.f32 %v183, %v252
    %v254 = vpop.f32.mrb[0].mxu0
    %255 = vdwg.mxu0
    %256 = vst [vmem:[#allocation7] sm:$0xff] %v253
    // Predicated region
    $region22: #{tpu_custom_call.1} parent=1 // pred_check
      _
    $region23: #{tpu_custom_call.1} parent=1 // pred_check_branch
      %258 = sbr.rel (0) target = $region25
    $region24: #{tpu_custom_call.1} parent=1 // pred_region
      %s260 = ssub.s32 128, 128
      %261 = vsyncadd [#allocation4], %s260
      %s263 = sshll.u32 [#allocation7], 4
      %s264 = int_to_ptr.vmem [resolvable:$true] %s263
      %266 = dma.vmem_to_hbm [thread:$0]  %s264, 128, %s3, [#allocation4]
    $region25: #{tpu_custom_call.1} parent=1 // pred_fallthru
      _
    // Predicated region
    $region26: #{tpu_custom_call.1} parent=1 // pred_check
      _
    $region27: #{tpu_custom_call.1} parent=1 // pred_check_branch
      %268 = sbr.rel (0) target = $region29
    $region28: #{tpu_custom_call.1} parent=1 // pred_region
      %269 = dma.done [#allocation4], 128
    $region29: #{tpu_custom_call.1} parent=1 // pred_fallthru
      _
    %270 = vsyncpa [#allocation3], 1
    %271 = vsyncpa [#allocation6], 1
    %272 = vsyncpa [#allocation4], 1

</llo_original>
